<compile_context>
chip_gen: v5e
topology: v5e:2x2
jax: 0.10.0
libtpu: 0.0.40
codegen_flags: <defaults>
</compile_context>

<pallas_src>
import jax
import jax.numpy as jnp
from jax.experimental import pallas as pl
from jax.experimental.pallas import tpu as pltpu


def _round_up(x, m):
    return (x + m - 1) // m * m


def _vmem_budget_bytes():
    """Generation-aware VMEM budget to declare to the compiler."""
    try:
        cap = int(pltpu.get_tpu_info().vmem_capacity_bytes)
    except Exception:
        cap = 64 * 1024 * 1024  # conservative fallback (v7x-sized per-core VMEM)
    # ~82% of physical VMEM, always leaving >= 8 MiB headroom for compiler
    # internal scratch.  v5e/v6e (128 MiB) -> ~105 MiB, v7x (64 MiB) -> ~52 MiB.
    budget = max(32 * 1024 * 1024, min(int(cap * 0.82), cap - 8 * 1024 * 1024))
    return min(cap, budget)


def mlp_layer_kernel(x_ref, w_ref, b_ref, o_ref, acc_ref):
    """One (tm, tk) x (tk, tn) MXU matmul step with f32 accumulation."""
    k = pl.program_id(2)

    @pl.when(k == 0)
    def _():
        acc_ref[...] = jnp.zeros_like(acc_ref)

    acc_ref[...] += jnp.dot(x_ref[...], w_ref[...],
                            preferred_element_type=jnp.float32)

    @pl.when(k == pl.num_programs(2) - 1)
    def _():
        # Bias add in f32, cast only at the store.
        o_ref[...] = (acc_ref[...] + b_ref[...]).astype(o_ref.dtype)


def _pad_to(a, shape, dtype):
    """Zero-pad/cast `a` to (shape, dtype); no copy if already there."""
    dtype = jnp.dtype(dtype)
    if tuple(a.shape) == tuple(shape) and a.dtype == dtype:
        return a
    if tuple(a.shape) == tuple(shape):
        return a.astype(dtype)
    idx = tuple(slice(0, s) for s in a.shape)
    return jnp.zeros(shape, dtype).at[idx].set(a.astype(dtype))


def mlp_layer_forward(x, weight, bias=None, *, compute_dtype=None,
                      out_dtype=None, max_tm=1024, max_tn=512, max_tk=512):
    """Pallas forward of MLPLayer: x @ weight (+ bias)."""
    N, K = x.shape
    Kw, F = weight.shape
    assert K == Kw, "input feature dim must match weight rows"

    if compute_dtype is None:
        compute_dtype = x.dtype
    compute_dtype = jnp.dtype(compute_dtype)
    if out_dtype is None:
        out_dtype = compute_dtype        # bf16 compute -> bf16 output
    out_dtype = jnp.dtype(out_dtype)
    itemsize = compute_dtype.itemsize
    out_itemsize = out_dtype.itemsize

    # Sublane alignment: 8 rows for 32-bit, 16 for 16-bit packed dtypes.
    row_align = 16 if itemsize < 4 else 8

    # --- tile selection -------------------------------------------------
    tk = min(max_tk, _round_up(K, 128))   # contraction tile (lane aligned)
    tn = min(max_tn, _round_up(F, 128))   # output-column tile (lane dense)

    budget = _vmem_budget_bytes()

    def vmem_usage(tm):
        return (2 * tm * tk * itemsize          # x tile (double buffered)
                + 2 * tk * tn * itemsize        # weight tile
                + 2 * tn * 4                    # bias tile (f32)
                + 2 * tm * tn * out_itemsize    # output tile
                + tm * tn * 4)                  # f32 accumulator scratch

    tm_cap = min(max_tm, _round_up(N, row_align))
    candidates = sorted(
        {tm_cap} | {v for v in (1024, 768, 512, 384, 256, 128, 64, 32, 16, 8)
                    if v <= tm_cap and v % row_align == 0},
        reverse=True)
    tm = candidates[-1]
    for cand in candidates:
        if vmem_usage(cand) <= budget:
            tm = cand
            break

    Np, Kp, Fp = _round_up(N, tm), _round_up(K, tk), _round_up(F, tn)

    # --- operand padding (no-ops when already aligned / right dtype) -----
    x_p = _pad_to(x, (Np, Kp), compute_dtype)
    w_p = _pad_to(weight, (Kp, Fp), compute_dtype)
    if bias is None:
        b_p = jnp.zeros((1, Fp), jnp.float32)
    else:
        b_p = _pad_to(bias.reshape(1, F), (1, Fp), jnp.float32)

    grid = (Np // tm, Fp // tn, Kp // tk)

    # Advisory cost (real, un-padded work) for XLA's scheduler.
    cost = pl.CostEstimate(
        flops=2 * N * K * F,
        transcendentals=0,
        bytes_accessed=(N * K * itemsize + K * F * itemsize
                        + F * 4 + N * F * out_itemsize),
    )

    out_p = pl.pallas_call(
        mlp_layer_kernel,
        out_shape=jax.ShapeDtypeStruct((Np, Fp), out_dtype),
        grid_spec=pltpu.PrefetchScalarGridSpec(
            num_scalar_prefetch=0,
            grid=grid,
            in_specs=[
                pl.BlockSpec((tm, tk), lambda i, j, k: (i, k)),   # x rows
                pl.BlockSpec((tk, tn), lambda i, j, k: (k, j)),   # weight tile
                pl.BlockSpec((1, tn), lambda i, j, k: (0, j)),    # bias tile
            ],
            out_specs=pl.BlockSpec((tm, tn), lambda i, j, k: (i, j)),
            scratch_shapes=[pltpu.VMEM((tm, tn), jnp.float32)],
        ),
        compiler_params=pltpu.CompilerParams(
            dimension_semantics=("parallel", "parallel", "arbitrary"),
            vmem_limit_bytes=int(budget),
        ),
        cost_estimate=cost,
    )(x_p, w_p, b_p)

    if (Np, Fp) != (N, F):
        out_p = out_p[:N, :F]
    return out_p


def init_mlp_layer(key, in_features, out_features):
    # MLPLayer.reset_parameters: stdv = 1/sqrt(out_features);
    # weight ~ Normal(mean=-stdv, std=stdv), bias ~ Normal(mean=-stdv, std=stdv)
    kw, kb = jax.random.split(key)
    stdv = 1.0 / jnp.sqrt(jnp.float32(out_features))
    w = jax.random.normal(kw, (in_features, out_features), jnp.float32) * stdv - stdv
    b = jax.random.normal(kb, (out_features,), jnp.float32) * stdv - stdv
    return w, b


if __name__ == "__main__":
    key = jax.random.PRNGKey(0)
    kx, kp, kx2, kp2 = jax.random.split(key, 4)

    # Small shapes; N deliberately not a multiple of the tile / lane widths.
    N, in_features, out_features = 24, 32, 16
    x = jax.random.normal(kx, (N, in_features), jnp.float32)
    w, b = init_mlp_layer(kp, in_features, out_features)

    out = jax.block_until_ready(mlp_layer_forward(x, w, b))
    out_nobias = jax.block_until_ready(mlp_layer_forward(x, w, None))

    ref = x @ w + b
    ref_nobias = x @ w
    assert out.shape == (N, out_features)
    assert jnp.allclose(out, ref, atol=1e-5, rtol=1e-5)
    assert jnp.allclose(out_nobias, ref_nobias, atol=1e-5, rtol=1e-5)

    # bf16 compute + bf16 output path (bandwidth optimization on v5e/v6e/v7x);
    # accumulation and bias add stay f32 inside the kernel.
    out_bf16 = jax.block_until_ready(
        mlp_layer_forward(x, w, b, compute_dtype=jnp.bfloat16))
    assert out_bf16.shape == (N, out_features)
    assert out_bf16.dtype == jnp.dtype(jnp.bfloat16)
    assert jnp.allclose(out_bf16.astype(jnp.float32), ref, atol=2e-1, rtol=1e-1)

    # Larger shapes exercising the multi-step F / K grid (accumulator pattern).
    N2, K2, F2 = 272, 640, 640
    x2 = jax.random.normal(kx2, (N2, K2), jnp.float32)
    w2, b2 = init_mlp_layer(kp2, K2, F2)
    out2 = jax.block_until_ready(mlp_layer_forward(x2, w2, b2))
    ref2 = x2 @ w2 + b2
    assert out2.shape == (N2, F2)
    assert jnp.allclose(out2, ref2, atol=5e-2, rtol=2e-2)

    print("KERNEL_OK")
</pallas_src>

<mosaic_0001>
module attributes {stable_mosaic.version = 11 : i64} {
  func.func @mlp_layer_kernel(%arg0: i32, %arg1: i32, %arg2: i32, %arg3: memref<24x128xf32, #tpu.memory_space<vmem>>, %arg4: memref<128x128xf32, #tpu.memory_space<vmem>>, %arg5: memref<1x128xf32, #tpu.memory_space<vmem>>, %arg6: memref<24x128xf32, #tpu.memory_space<vmem>>, %arg7: memref<24x128xf32, #tpu.memory_space<vmem>>) attributes {dimension_semantics = [#tpu.dimension_semantics<parallel>, #tpu.dimension_semantics<parallel>, #tpu.dimension_semantics<arbitrary>], iteration_bounds = array<i64: 1, 1, 1>, scalar_prefetch = 0 : i64, scratch_operands = 1 : i64, tpu.core_type = #tpu.core_type<tc>, window_params = [{transform_indices = @transform_0, window_bounds = array<i64: 24, 128>}, {transform_indices = @transform_1, window_bounds = array<i64: 128, 128>}, {transform_indices = @transform_2, window_bounds = array<i64: 1, 128>}, {transform_indices = @transform_3, window_bounds = array<i64: 24, 128>}]} {
    %c0_i32 = arith.constant 0 : i32
    %0 = arith.cmpi eq, %arg2, %c0_i32 : i32
    %1 = arith.extui %0 : i1 to i32
    %c0_i32_0 = arith.constant 0 : i32
    %2 = arith.cmpi ne, %1, %c0_i32_0 : i32
    scf.if %2 {
      %cst_10 = arith.constant 0.000000e+00 : f32
      %12 = vector.broadcast %cst_10 : f32 to vector<24x128xf32>
      %c0_11 = arith.constant 0 : index
      %c0_12 = arith.constant 0 : index
      %13 = vector.load %arg7[%c0_11, %c0_12] : memref<24x128xf32, #tpu.memory_space<vmem>>, vector<24x128xf32>
      tpu.vector_store %arg7[%c0_11, %c0_12], %12 {strides = array<i32>} : memref<24x128xf32, #tpu.memory_space<vmem>>, vector<24x128xf32>,
    } else {
    }
    %c0 = arith.constant 0 : index
    %c0_1 = arith.constant 0 : index
    %3 = vector.load %arg7[%c0, %c0_1] : memref<24x128xf32, #tpu.memory_space<vmem>>, vector<24x128xf32>
    %c0_2 = arith.constant 0 : index
    %c0_3 = arith.constant 0 : index
    %4 = vector.load %arg3[%c0_2, %c0_3] : memref<24x128xf32, #tpu.memory_space<vmem>>, vector<24x128xf32>
    %c0_4 = arith.constant 0 : index
    %c0_5 = arith.constant 0 : index
    %5 = vector.load %arg4[%c0_4, %c0_5] : memref<128x128xf32, #tpu.memory_space<vmem>>, vector<128x128xf32>
    %cst = arith.constant dense<0.000000e+00> : vector<24x128xf32>
    %6 = tpu.matmul %4, %5, %cst {dimension_numbers = #tpu.dot_dimension_numbers<[1], [0], [0], [1], [0, 0, 1, 1], [], []>} : vector<24x128xf32>, vector<128x128xf32>, vector<24x128xf32> -> vector<24x128xf32>
    %7 = arith.addf %3, %6 : vector<24x128xf32>
    %c0_6 = arith.constant 0 : index
    %c0_7 = arith.constant 0 : index
    %8 = vector.load %arg7[%c0_6, %c0_7] : memref<24x128xf32, #tpu.memory_space<vmem>>, vector<24x128xf32>
    tpu.vector_store %arg7[%c0_6, %c0_7], %7 {strides = array<i32>} : memref<24x128xf32, #tpu.memory_space<vmem>>, vector<24x128xf32>,
    %c0_i32_8 = arith.constant 0 : i32
    %9 = arith.cmpi eq, %arg2, %c0_i32_8 : i32
    %10 = arith.extui %9 : i1 to i32
    %c0_i32_9 = arith.constant 0 : i32
    %11 = arith.cmpi ne, %10, %c0_i32_9 : i32
    scf.if %11 {
      %c0_10 = arith.constant 0 : index
      %c0_11 = arith.constant 0 : index
      %12 = vector.load %arg7[%c0_10, %c0_11] : memref<24x128xf32, #tpu.memory_space<vmem>>, vector<24x128xf32>
      %c0_12 = arith.constant 0 : index
      %c0_13 = arith.constant 0 : index
      %13 = vector.load %arg5[%c0_12, %c0_13] : memref<1x128xf32, #tpu.memory_space<vmem>>, vector<1x128xf32>
      %14 = vector.broadcast %13 : vector<1x128xf32> to vector<24x128xf32>
      %15 = arith.addf %12, %14 : vector<24x128xf32>
      %c0_14 = arith.constant 0 : index
      %c0_15 = arith.constant 0 : index
      %16 = vector.load %arg6[%c0_14, %c0_15] : memref<24x128xf32, #tpu.memory_space<vmem>>, vector<24x128xf32>
      tpu.vector_store %arg6[%c0_14, %c0_15], %15 {strides = array<i32>} : memref<24x128xf32, #tpu.memory_space<vmem>>, vector<24x128xf32>,
    } else {
    }
    return
  }
  func.func @transform_0(%arg0: i32, %arg1: i32, %arg2: i32) -> (i32, i32) {
    %c0_i32 = arith.constant 0 : i32
    return %arg0, %arg2 : i32, i32
  }
  func.func @transform_1(%arg0: i32, %arg1: i32, %arg2: i32) -> (i32, i32) {
    %c0_i32 = arith.constant 0 : i32
    return %arg2, %arg1 : i32, i32
  }
  func.func @transform_2(%arg0: i32, %arg1: i32, %arg2: i32) -> (i32, i32) {
    %c0_i32 = arith.constant 0 : i32
    %c0_i32_0 = arith.constant 0 : i32
    return %c0_i32, %arg1 : i32, i32
  }
  func.func @transform_3(%arg0: i32, %arg1: i32, %arg2: i32) -> (i32, i32) {
    %c0_i32 = arith.constant 0 : i32
    return %arg0, %arg1 : i32, i32
  }
}

</mosaic_0001>

<llo_original>
// kernel: tpu_custom_call.1
$region0: #{tpu_custom_call.1}
  #allocation0 [shape = 'u32[]', space=smem, size = 0x4, offset = 0x4, fixed_abs, tag = 'smem constant byte address 0x4 - core index']
  #allocation1 [shape = 'u32[72,128]{1,0:T(1,128)}', space=vmem, size = 0x9000, scoped, tag = 'internal scratch']
  #allocation2 [shape = 'f32[24,128]{1,0:T(8,128)}', space=vmem, size = 0x3000, scoped, tag = 'scratch operand']
  %s0 = inlined_call_operand.hbm [shape: f32[24,128], index: 0, kind: input, shape index: {}]
  %s1 = inlined_call_operand.hbm [shape: f32[128,128], index: 1, kind: input, shape index: {}]
  %s2 = inlined_call_operand.vmem [shape: f32[1,128], index: 2, kind: input, shape index: {}]
  %s3 = inlined_call_operand.hbm [shape: f32[24,128], index: 3, kind: output, shape index: {}]
  %s4 = sld [smem:[#allocation0]]
  $region38: #{tpu_custom_call.1} parent=0
    _
  %s6 = ssub.s32 1, %s4
  %s7 = scalar_select 0, %s6, %s4
  $region1: #{tpu_custom_call.1} parent=0
    #allocation3 [shape = 'u8[12288]{0}', space=vmem, size = 0x3000, scoped, tag = 'input window, operand 0, single buffered']
    #allocation4 [shape = 's32[1]{0}', space=sflag, size = 0x4, scoped, tag = 'scoped memory for tpu_custom_call.1']
    #allocation5 [shape = 's32[1]{0}', space=sflag, size = 0x4, scoped, tag = 'scoped memory for tpu_custom_call.1']
    #allocation6 [shape = 'u8[65536]{0}', space=vmem, size = 0x10000, scoped, tag = 'input window, operand 1, single buffered']
    #allocation7 [shape = 's32[1]{0}', space=sflag, size = 0x4, scoped, tag = 'scoped memory for tpu_custom_call.1']
    #allocation8 [shape = 'u8[12288]{0}', space=vmem, size = 0x3000, scoped, tag = 'output window, operand 0, single buffered']
    %8 = vsyncpa [#allocation4], 0
    %9 = vsyncpa [#allocation7], 0
    %10 = vsyncpa [#allocation5], 0
    // Predicated region
    $region2: #{tpu_custom_call.1} parent=1 // pred_check
      _
    $region3: #{tpu_custom_call.1} parent=1 // pred_check_branch
      %12 = sbr.rel (0) target = $region5
    $region4: #{tpu_custom_call.1} parent=1 // pred_region
      %14 = vsyncadd [#allocation4], 0
      %s15 = sshll.u32 %s0, 4
      %s16 = int_to_ptr.hbm [resolvable:$true] %s15
      %s17 = sshll.u32 [#allocation3], 4
      %s18 = int_to_ptr.vmem [resolvable:$true] %s17
      %23 = dma.hbm_to_vmem [thread:$0]  %s16, 384, %s18, [#allocation4], 128, 128, 8
    $region5: #{tpu_custom_call.1} parent=1 // pred_fallthru
      _
    // Predicated region
    $region6: #{tpu_custom_call.1} parent=1 // pred_check
      _
    $region7: #{tpu_custom_call.1} parent=1 // pred_check_branch
      %25 = sbr.rel (0) target = $region9
    $region8: #{tpu_custom_call.1} parent=1 // pred_region
      %27 = vsyncadd [#allocation7], 0
      %s28 = sshll.u32 %s1, 4
      %s29 = int_to_ptr.hbm [resolvable:$true] %s28
      %s30 = sshll.u32 [#allocation6], 4
      %s31 = int_to_ptr.vmem [resolvable:$true] %s30
      %36 = dma.hbm_to_vmem [thread:$0]  %s29, 2048, %s31, [#allocation7], 128, 128, 8
    $region9: #{tpu_custom_call.1} parent=1 // pred_fallthru
      _
    // Predicated region
    $region10: #{tpu_custom_call.1} parent=1 // pred_check
      _
    $region11: #{tpu_custom_call.1} parent=1 // pred_check_branch
      %38 = sbr.rel (0) target = $region13
    $region12: #{tpu_custom_call.1} parent=1 // pred_region
      _
    $region13: #{tpu_custom_call.1} parent=1 // pred_fallthru
      _
    // Predicated region
    $region14: #{tpu_custom_call.1} parent=1 // pred_check
      _
    $region15: #{tpu_custom_call.1} parent=1 // pred_check_branch
      %40 = sbr.rel (0) target = $region17
    $region16: #{tpu_custom_call.1} parent=1 // pred_region
      %42 = dma.done [#allocation4], 384
    $region17: #{tpu_custom_call.1} parent=1 // pred_fallthru
      _
    // Predicated region
    $region18: #{tpu_custom_call.1} parent=1 // pred_check
      _
    $region19: #{tpu_custom_call.1} parent=1 // pred_check_branch
      %44 = sbr.rel (0) target = $region21
    $region20: #{tpu_custom_call.1} parent=1 // pred_region
      %46 = dma.done [#allocation7], 2048
    $region21: #{tpu_custom_call.1} parent=1 // pred_fallthru
      _
    %p47 = scmp.eq.s32.totalorder 0, 0
    // Predicated region
    $region22: #{tpu_custom_call.1} parent=1 // pred_check
      %p48 = pneg %p47
    $region23: #{tpu_custom_call.1} parent=1 // pred_check_branch
      %50 = sbr.rel (%p48) target = $region25
    $region24: #{tpu_custom_call.1} parent=1 // pred_region
      %51 = vst [vmem:[#allocation2] sm:$0xff] 0.0
      %52 = vst [vmem:[#allocation2 + $0x8] sm:$0xff] 0.0
      %53 = vst [vmem:[#allocation2 + $0x10] sm:$0xff] 0.0
    $region25: #{tpu_custom_call.1} parent=1 // pred_fallthru
      _
    %v54 = vld [vmem:[#allocation2] sm:$0xff]
    %v55 = vld [vmem:[#allocation2 + $0x8] sm:$0xff]
    %v56 = vld [vmem:[#allocation2 + $0x10] sm:$0xff]
    %v57 = vld [vmem:[#allocation3] sm:$0xff]
    %v58 = vld [vmem:[#allocation3 + $0x8] sm:$0xff]
    %v59 = vld [vmem:[#allocation3 + $0x10] sm:$0xff]
    %v60 = vld [vmem:[#allocation6] sm:$0xff]
    %v61 = vld [vmem:[#allocation6 + $0x8] sm:$0xff]
    %v62 = vld [vmem:[#allocation6 + $0x10] sm:$0xff]
    %v63 = vld [vmem:[#allocation6 + $0x18] sm:$0xff]
    %v64 = vld [vmem:[#allocation6 + $0x20] sm:$0xff]
    %v65 = vld [vmem:[#allocation6 + $0x28] sm:$0xff]
    %v66 = vld [vmem:[#allocation6 + $0x30] sm:$0xff]
    %v67 = vld [vmem:[#allocation6 + $0x38] sm:$0xff]
    %v68 = vld [vmem:[#allocation6 + $0x40] sm:$0xff]
    %v69 = vld [vmem:[#allocation6 + $0x48] sm:$0xff]
    %v70 = vld [vmem:[#allocation6 + $0x50] sm:$0xff]
    %v71 = vld [vmem:[#allocation6 + $0x58] sm:$0xff]
    %v72 = vld [vmem:[#allocation6 + $0x60] sm:$0xff]
    %v73 = vld [vmem:[#allocation6 + $0x68] sm:$0xff]
    %v74 = vld [vmem:[#allocation6 + $0x70] sm:$0xff]
    %v75 = vld [vmem:[#allocation6 + $0x78] sm:$0xff]
    %76 = vmatpush.msra.mxu0 %v75
    %77 = vmatpush.msra.mxu0 %v74
    %78 = vmatpush.msra.mxu0 %v73
    %79 = vmatpush.msra.mxu0 %v72
    %80 = vmatpush.msra.mxu0 %v71
    %81 = vmatpush.msra.mxu0 %v70
    %82 = vmatpush.msra.mxu0 %v69
    %83 = vmatpush.msra.mxu0 %v68
    %84 = vmatpush.msra.mxu0 %v67
    %85 = vmatpush.msra.mxu0 %v66
    %86 = vmatpush.msra.mxu0 %v65
    %87 = vmatpush.msra.mxu0 %v64
    %88 = vmatpush.msra.mxu0 %v63
    %89 = vmatpush.msra.mxu0 %v62
    %90 = vmatpush.msra.mxu0 %v61
    %91 = vmatpush.msra.mxu0 %v60
    %92 = vmatmul.f32.gmra.mxu0 %v57
    %v93 = vpop.f32.mrf.mxu0
    %v94 = vadd.f32 0.0, %v93
    %95 = vmatmul.f32.gmra.mxu0 %v58
    %v96 = vpop.f32.mrf.mxu0
    %v97 = vadd.f32 0.0, %v96
    %98 = vmatmul.f32.gmra.mxu0 %v59
    %v99 = vpop.f32.mrf.mxu0
    %v100 = vadd.f32 0.0, %v99
    %101 = vdwg.mxu0
    %v102 = vadd.f32 %v54, %v94
    %v103 = vadd.f32 %v55, %v97
    %v104 = vadd.f32 %v56, %v100
    %105 = vst [vmem:[#allocation2] sm:$0xff] %v102
    %106 = vst [vmem:[#allocation2 + $0x8] sm:$0xff] %v103
    %107 = vst [vmem:[#allocation2 + $0x10] sm:$0xff] %v104
    // Predicated region
    $region26: #{tpu_custom_call.1} parent=1 // pred_check
      %p108 = pneg %p47
    $region27: #{tpu_custom_call.1} parent=1 // pred_check_branch
      %110 = sbr.rel (%p108) target = $region29
    $region28: #{tpu_custom_call.1} parent=1 // pred_region
      %v111 = vld [vmem:[#allocation2] sm:$0xff]
      %v112 = vld [vmem:[#allocation2 + $0x8] sm:$0xff]
      %v113 = vld [vmem:[#allocation2 + $0x10] sm:$0xff]
      %v114 = vld [vmem:[%s2] sm:$0x1]
      %v116 = vperm.slane %v114, 0
      %v118 = vadd.f32 %v111, %v116
      %v119 = vadd.f32 %v112, %v116
      %v120 = vadd.f32 %v113, %v116
      %121 = vst [vmem:[#allocation8] sm:$0xff] %v118
      %122 = vst [vmem:[#allocation8 + $0x8] sm:$0xff] %v119
      %123 = vst [vmem:[#allocation8 + $0x10] sm:$0xff] %v120
    $region29: #{tpu_custom_call.1} parent=1 // pred_fallthru
      _
    // Predicated region
    $region30: #{tpu_custom_call.1} parent=1 // pred_check
      _
    $region31: #{tpu_custom_call.1} parent=1 // pred_check_branch
      %125 = sbr.rel (0) target = $region33
    $region32: #{tpu_custom_call.1} parent=1 // pred_region
      %127 = vsyncadd [#allocation5], 0
      %s128 = sshll.u32 [#allocation8], 4
      %s129 = int_to_ptr.vmem [resolvable:$true] %s128
      %s130 = sshll.u32 %s3, 4
      %s131 = int_to_ptr.hbm [resolvable:$true] %s130
      %136 = dma.vmem_to_hbm [thread:$0]  %s129, 384, %s131, [#allocation5], 128, 128, 8
    $region33: #{tpu_custom_call.1} parent=1 // pred_fallthru
      _
    // Predicated region
    $region34: #{tpu_custom_call.1} parent=1 // pred_check
      _
    $region35: #{tpu_custom_call.1} parent=1 // pred_check_branch
      %138 = sbr.rel (0) target = $region37
    $region36: #{tpu_custom_call.1} parent=1 // pred_region
      %140 = dma.done [#allocation5], 384
    $region37: #{tpu_custom_call.1} parent=1 // pred_fallthru
      _
    %141 = vsyncpa [#allocation4], 1
    %142 = vsyncpa [#allocation7], 1
    %143 = vsyncpa [#allocation5], 1

</llo_original>
